<compile_context>
chip_gen: v7x
topology: tpu7x:2x2x1
jax: 0.10.0
libtpu: 0.0.40
codegen_flags: <defaults>
</compile_context>

<pallas_src>
import jax
import jax.numpy as jnp
from jax.experimental import pallas as pl
from jax.experimental.pallas import tpu as pltpu


def _round_up(x: int, m: int) -> int:
    return ((x + m - 1) // m) * m


def _cdiv(a: int, b: int) -> int:
    return (a + b - 1) // b


def _largest_dividing_tile(total: int, max_tile: int, quantum: int = 128) -> int:
    """Largest multiple of `quantum` that divides `total` and is <= max_tile."""
    best = quantum
    t = quantum
    while t <= min(total, max_tile):
        if total % t == 0:
            best = t
        t += quantum
    return best


def _bspec(shape, index_map, *, single_buffer: bool = False):
    """BlockSpec, optionally single-buffered for grid-invariant blocks."""
    if single_buffer:
        try:
            return pl.BlockSpec(shape, index_map, pipeline_mode=pl.Buffered(1))
        except TypeError:
            pass  # older Pallas without pipeline_mode: fall back to default buffering
    return pl.BlockSpec(shape, index_map)


# ---------------- kernels ----------------

def _agg_kernel(x_ref, w_ref, b_ref, o_ref):
    # x_ref: (tm, K) bf16, w_ref: (K, N) bf16, b_ref: (1, N) f32
    acc = jnp.dot(x_ref[...], w_ref[...], preferred_element_type=jnp.float32)
    o_ref[...] = (acc + b_ref[...]).astype(o_ref.dtype)


def _agg_kernel_tiled(x_ref, w_ref, b_ref, o_ref, acc_ref):
    # Large-H fallback: grid = (M tiles, N tiles, K tiles), f32 accumulator.
    k = pl.program_id(2)

    @pl.when(k == 0)
    def _():
        acc_ref[...] = jnp.zeros_like(acc_ref)

    acc_ref[...] += jnp.dot(x_ref[...], w_ref[...], preferred_element_type=jnp.float32)

    @pl.when(k == pl.num_programs(2) - 1)
    def _():
        o_ref[...] = (acc_ref[...] + b_ref[...]).astype(o_ref.dtype)


# ---------------- wrapper ----------------

def aggregate_add_linear(x, w_stack, b_stack, *, tm_max=1024):
    """Aggregate(add, Linear x L) forward.

    x: [B, S, H_in], w_stack: [L, H_out, H_in] (PyTorch Linear layout), b_stack: [L, H_out].
    Returns [B, S, H_out] in x.dtype.
    """
    B, S, H_in = x.shape
    L, H_out, H_in_w = w_stack.shape
    assert H_in == H_in_w
    assert L >= 1, "Aggregate must have at least one layer"

    out_dtype = x.dtype
    out_itemsize = jnp.dtype(out_dtype).itemsize
    bf = 2  # bf16 itemsize

    # --- Algebraic collapse of the layer reduction (tiny XLA reduce over L) ---
    w_sum = jnp.sum(w_stack, axis=0)                      # (H_out, H_in)
    b_sum = jnp.sum(b_stack, axis=0)                      # (H_out,)

    # bf16 operands for the MXU; bias and accumulation stay f32.
    w_t = w_sum.T.astype(jnp.bfloat16)                    # (H_in, H_out)
    M = B * S
    x2d = x.reshape(M, H_in).astype(jnp.bfloat16)

    # --- Lane-dense padding of the hidden dims only (M is never padded) ---
    H_in_p = _round_up(H_in, 128)
    H_out_p = _round_up(H_out, 128)
    if H_in_p != H_in:
        # K padding must be real zeros (it participates in the contraction).
        x2d = jnp.zeros((M, H_in_p), jnp.bfloat16).at[:, :H_in].set(x2d)
    w_p = w_t
    if H_in_p != H_in or H_out_p != H_out:
        w_p = jnp.zeros((H_in_p, H_out_p), jnp.bfloat16).at[:H_in, :H_out].set(w_t)
    b_p = b_sum.astype(jnp.float32)
    if H_out_p != H_out:
        b_p = jnp.zeros((H_out_p,), jnp.float32).at[:H_out].set(b_p)
    b_p = b_p.reshape(1, H_out_p)

    # --- Generation-aware VMEM budget ---
    try:
        vmem_cap = int(pltpu.get_tpu_info().vmem_capacity_bytes)
    except Exception:
        vmem_cap = 64 * 1024 * 1024          # conservative (v7x-sized) fallback
    vmem_limit = (vmem_cap * 3) // 4         # scoped limit handed to the compiler
    budget = (vmem_cap * 7) // 10            # what our resident tiles may consume

    # --- N / K tiling so the resident weight block always fits VMEM ---
    if H_in_p * H_out_p * bf <= budget // 2:
        kt, tn, nk = H_in_p, H_out_p, 1                       # whole W resident
    else:
        tn_fit = ((budget // 2) // (H_in_p * bf * 2)) // 128 * 128
        if tn_fit >= 128:
            kt = H_in_p
            tn = min(H_out_p, tn_fit)
            nk = 1
        else:
            tn = min(H_out_p, 256)
            kt_fit = max(128, ((budget // 2) // (tn * bf * 2)) // 128 * 128)
            kt = _largest_dividing_tile(H_in_p, kt_fit)       # kt must divide H_in_p
            nk = H_in_p // kt
    nn = _cdiv(H_out_p, tn)
    single_w = (nn == 1 and nk == 1)

    # --- Row tile: multiple of 16 (bf16), as large as the budget allows ---
    resident_w = kt * tn * bf * (1 if single_w else 2)
    resident_b = tn * 4 * (1 if nn == 1 else 2)
    per_row = (kt * bf + tn * out_itemsize) * 2               # x + out, double-buffered
    if not single_w:
        per_row += tn * 4                                     # f32 accumulator scratch
    rows_fit = (budget - resident_w - resident_b) // max(per_row, 1)
    rows_fit = max(16, (rows_fit // 16) * 16)
    tm = min(int(tm_max), int(rows_fit), _round_up(M, 16))
    # Keep >= ~4 row tiles so v7x's 2 TensorCores both get work and the x/out
    # DMAs can be pipelined across grid steps.
    tm = max(16, min(tm, _round_up(_cdiv(M, 4), 16)))
    nm = _cdiv(M, tm)

    compiler_params = pltpu.CompilerParams(
        dimension_semantics=("parallel",) if single_w
        else ("parallel", "parallel", "arbitrary"),
        vmem_limit_bytes=int(vmem_limit),
    )

    if single_w:
        grid = (nm,)
        in_specs = [
            pl.BlockSpec((tm, kt), lambda i: (i, 0)),                    # x row tile
            _bspec((kt, tn), lambda i: (0, 0), single_buffer=True),      # summed W (invariant)
            _bspec((1, tn), lambda i: (0, 0), single_buffer=True),       # summed bias (invariant)
        ]
        out_specs = pl.BlockSpec((tm, tn), lambda i: (i, 0))
        scratch_shapes = ()
        kernel = _agg_kernel
    else:
        grid = (nm, nn, nk)
        in_specs = [
            pl.BlockSpec((tm, kt), lambda i, j, k: (i, k)),
            pl.BlockSpec((kt, tn), lambda i, j, k: (k, j)),
            pl.BlockSpec((1, tn), lambda i, j, k: (0, j)),
        ]
        out_specs = pl.BlockSpec((tm, tn), lambda i, j, k: (i, j))
        scratch_shapes = (pltpu.VMEM((tm, tn), jnp.float32),)
        kernel = _agg_kernel_tiled

    out_p = pl.pallas_call(
        kernel,
        out_shape=jax.ShapeDtypeStruct((M, H_out_p), out_dtype),
        grid_spec=pltpu.PrefetchScalarGridSpec(
            num_scalar_prefetch=0,
            grid=grid,
            in_specs=in_specs,
            out_specs=out_specs,
            scratch_shapes=scratch_shapes,
        ),
        compiler_params=compiler_params,
    )(x2d, w_p, b_p)

    out = out_p if H_out_p == H_out else out_p[:, :H_out]
    return out.reshape(B, S, H_out)


if __name__ == "__main__":
    # Small shapes consistent with the module: 3 Linear(H, H) layers aggregated by add.
    B, S, H = 2, 8, 32
    L = 3

    key = jax.random.PRNGKey(0)
    kx, kw, kb = jax.random.split(key, 3)

    x = jax.random.normal(kx, (B, S, H), dtype=jnp.float32)
    # Deterministic synthetic parameters (PyTorch Linear weight layout: (out, in)).
    w_stack = 0.02 * jax.random.normal(kw, (L, H, H), dtype=jnp.float32)
    b_stack = 0.01 * jax.random.normal(kb, (L, H), dtype=jnp.float32)

    out = jax.block_until_ready(aggregate_add_linear(x, w_stack, b_stack))

    # Pure-JAX f32 reference of the Aggregate forward (layer-by-layer add over Linears).
    ref = None
    for l in range(L):
        y = x @ w_stack[l].T + b_stack[l]
        ref = y if ref is None else ref + y

    assert out.shape == (B, S, H)
    # bf16 matmul operands (f32 accumulation) vs. the all-f32 reference -> bf16-level tol.
    assert jnp.allclose(out, ref, atol=2e-2, rtol=2e-2), "mismatch vs reference"

    print("KERNEL_OK")
</pallas_src>

<mosaic_0001>
module attributes {stable_mosaic.version = 11 : i64} {
  func.func @_agg_kernel(%arg0: i32, %arg1: memref<16x128xbf16, #tpu.memory_space<vmem>>, %arg2: memref<128x128xbf16, #tpu.memory_space<vmem>>, %arg3: memref<1x128xf32, #tpu.memory_space<vmem>>, %arg4: memref<16x128xf32, #tpu.memory_space<vmem>>) attributes {dimension_semantics = [#tpu.dimension_semantics<parallel>], iteration_bounds = array<i64: 1>, scalar_prefetch = 0 : i64, scratch_operands = 0 : i64, tpu.core_type = #tpu.core_type<tc>, window_params = [{transform_indices = @transform_0, window_bounds = array<i64: 16, 128>}, {pipeline_mode = #tpu.pipeline_mode<synchronous>, transform_indices = @transform_1, window_bounds = array<i64: 128, 128>}, {pipeline_mode = #tpu.pipeline_mode<synchronous>, transform_indices = @transform_2, window_bounds = array<i64: 1, 128>}, {transform_indices = @transform_3, window_bounds = array<i64: 16, 128>}]} {
    %c0 = arith.constant 0 : index
    %c0_0 = arith.constant 0 : index
    %0 = vector.load %arg1[%c0, %c0_0] : memref<16x128xbf16, #tpu.memory_space<vmem>>, vector<16x128xbf16>
    %c0_1 = arith.constant 0 : index
    %c0_2 = arith.constant 0 : index
    %1 = vector.load %arg2[%c0_1, %c0_2] : memref<128x128xbf16, #tpu.memory_space<vmem>>, vector<128x128xbf16>
    %cst = arith.constant dense<0.000000e+00> : vector<16x128xf32>
    %2 = tpu.matmul %0, %1, %cst {dimension_numbers = #tpu.dot_dimension_numbers<[1], [0], [0], [1], [0, 0, 1, 1], [], []>} : vector<16x128xbf16>, vector<128x128xbf16>, vector<16x128xf32> -> vector<16x128xf32>
    %c0_3 = arith.constant 0 : index
    %c0_4 = arith.constant 0 : index
    %3 = vector.load %arg3[%c0_3, %c0_4] : memref<1x128xf32, #tpu.memory_space<vmem>>, vector<1x128xf32>
    %4 = vector.broadcast %3 : vector<1x128xf32> to vector<16x128xf32>
    %5 = arith.addf %2, %4 : vector<16x128xf32>
    %c0_5 = arith.constant 0 : index
    %c0_6 = arith.constant 0 : index
    %6 = vector.load %arg4[%c0_5, %c0_6] : memref<16x128xf32, #tpu.memory_space<vmem>>, vector<16x128xf32>
    tpu.vector_store %arg4[%c0_5, %c0_6], %5 {strides = array<i32>} : memref<16x128xf32, #tpu.memory_space<vmem>>, vector<16x128xf32>,
    return
  }
  func.func @transform_0(%arg0: i32) -> (i32, i32) {
    %c0_i32 = arith.constant 0 : i32
    %c0_i32_0 = arith.constant 0 : i32
    return %arg0, %c0_i32 : i32, i32
  }
  func.func @transform_1(%arg0: i32) -> (i32, i32) {
    %c0_i32 = arith.constant 0 : i32
    %c0_i32_0 = arith.constant 0 : i32
    %c0_i32_1 = arith.constant 0 : i32
    return %c0_i32, %c0_i32_0 : i32, i32
  }
  func.func @transform_2(%arg0: i32) -> (i32, i32) {
    %c0_i32 = arith.constant 0 : i32
    %c0_i32_0 = arith.constant 0 : i32
    %c0_i32_1 = arith.constant 0 : i32
    return %c0_i32, %c0_i32_0 : i32, i32
  }
  func.func @transform_3(%arg0: i32) -> (i32, i32) {
    %c0_i32 = arith.constant 0 : i32
    %c0_i32_0 = arith.constant 0 : i32
    return %arg0, %c0_i32 : i32, i32
  }
}

</mosaic_0001>

<llo_original>
// kernel: tpu_custom_call.1
$region0: #{tpu_custom_call.1}
  #allocation0 [shape = 'u32[]', space=smem, size = 0x4, offset = 0x4, fixed_abs, tag = 'smem constant byte address 0x4 - core index']
  #allocation1 [shape = 'u32[144,128]{1,0:T(1,128)}', space=vmem, size = 0x12000, scoped, tag = 'internal scratch']
  %s0 = inlined_call_operand.hbm [shape: bf16[16,128], index: 0, kind: input, shape index: {}]
  %s1 = inlined_call_operand.hbm [shape: bf16[128,128], index: 1, kind: input, shape index: {}]
  %s2 = inlined_call_operand.vmem [shape: f32[1,128], index: 2, kind: input, shape index: {}]
  %s3 = inlined_call_operand.hbm [shape: f32[16,128], index: 3, kind: output, shape index: {}]
  %s4 = sld [smem:[#allocation0]]
  $region30: #{tpu_custom_call.1} parent=0
    _
  %s6 = ssub.s32 1, %s4
  %s7 = scalar_select 0, %s6, %s4
  $region1: #{tpu_custom_call.1} parent=0
    #allocation2 [shape = 'u8[4096]{0}', space=vmem, size = 0x1000, scoped, tag = 'input window, operand 0, single buffered']
    #allocation3 [shape = 's32[1]{0}', space=sflag, size = 0x4, scoped, tag = 'scoped memory for tpu_custom_call.1']
    #allocation4 [shape = 's32[1]{0}', space=sflag, size = 0x4, scoped, tag = 'scoped memory for tpu_custom_call.1']
    #allocation5 [shape = 'u8[32768]{0}', space=vmem, size = 0x8000, scoped, tag = 'input window, operand 1, single buffered']
    #allocation6 [shape = 's32[1]{0}', space=sflag, size = 0x4, scoped, tag = 'scoped memory for tpu_custom_call.1']
    #allocation7 [shape = 'u8[8192]{0}', space=vmem, size = 0x2000, scoped, tag = 'output window, operand 0, single buffered']
    %8 = vsyncpa [#allocation3], 0
    %9 = vsyncpa [#allocation6], 0
    %10 = vsyncpa [#allocation4], 0
    // Predicated region
    $region2: #{tpu_custom_call.1} parent=1 // pred_check
      _
    $region3: #{tpu_custom_call.1} parent=1 // pred_check_branch
      %12 = sbr.rel (0) target = $region5
    $region4: #{tpu_custom_call.1} parent=1 // pred_region
      %s14 = ssub.s32 128, 128
      %15 = vsyncadd [#allocation3], %s14
      %s16 = sshll.u32 [#allocation2], 4
      %s17 = int_to_ptr.vmem [resolvable:$true] %s16
      %22 = dma.hbm_to_vmem [thread:$0]  %s0, 128, %s17, [#allocation3], 64, 64, 4
    $region5: #{tpu_custom_call.1} parent=1 // pred_fallthru
      _
    // Predicated region
    $region6: #{tpu_custom_call.1} parent=1 // pred_check
      _
    $region7: #{tpu_custom_call.1} parent=1 // pred_check_branch
      %24 = sbr.rel (0) target = $region9
    $region8: #{tpu_custom_call.1} parent=1 // pred_region
      %s26 = ssub.s32 1024, 1024
      %27 = vsyncadd [#allocation6], %s26
      %s28 = sshll.u32 [#allocation5], 4
      %s29 = int_to_ptr.vmem [resolvable:$true] %s28
      %34 = dma.hbm_to_vmem [thread:$0]  %s1, 1024, %s29, [#allocation6], 64, 64, 4
    $region9: #{tpu_custom_call.1} parent=1 // pred_fallthru
      _
    // Predicated region
    $region10: #{tpu_custom_call.1} parent=1 // pred_check
      _
    $region11: #{tpu_custom_call.1} parent=1 // pred_check_branch
      %36 = sbr.rel (0) target = $region13
    $region12: #{tpu_custom_call.1} parent=1 // pred_region
      _
    $region13: #{tpu_custom_call.1} parent=1 // pred_fallthru
      _
    // Predicated region
    $region14: #{tpu_custom_call.1} parent=1 // pred_check
      _
    $region15: #{tpu_custom_call.1} parent=1 // pred_check_branch
      %38 = sbr.rel (0) target = $region17
    $region16: #{tpu_custom_call.1} parent=1 // pred_region
      %39 = dma.done [#allocation3], 128
    $region17: #{tpu_custom_call.1} parent=1 // pred_fallthru
      _
    // Predicated region
    $region18: #{tpu_custom_call.1} parent=1 // pred_check
      _
    $region19: #{tpu_custom_call.1} parent=1 // pred_check_branch
      %41 = sbr.rel (0) target = $region21
    $region20: #{tpu_custom_call.1} parent=1 // pred_region
      %42 = dma.done [#allocation6], 1024
    $region21: #{tpu_custom_call.1} parent=1 // pred_fallthru
      _
    %v44 = vld [vmem:[#allocation2] sm:$0xf]
    %v45 = vld [vmem:[#allocation2 + $0x4] sm:$0xf]
    %v46 = vld [vmem:[#allocation5] sm:$0xf]
    %v47 = vld [vmem:[#allocation5 + $0x4] sm:$0xf]
    %v48 = vld [vmem:[#allocation5 + $0x8] sm:$0xf]
    %v49 = vld [vmem:[#allocation5 + $0xc] sm:$0xf]
    %v50 = vld [vmem:[#allocation5 + $0x10] sm:$0xf]
    %v51 = vld [vmem:[#allocation5 + $0x14] sm:$0xf]
    %v52 = vld [vmem:[#allocation5 + $0x18] sm:$0xf]
    %v53 = vld [vmem:[#allocation5 + $0x1c] sm:$0xf]
    %v54 = vld [vmem:[#allocation5 + $0x20] sm:$0xf]
    %v55 = vld [vmem:[#allocation5 + $0x24] sm:$0xf]
    %v56 = vld [vmem:[#allocation5 + $0x28] sm:$0xf]
    %v57 = vld [vmem:[#allocation5 + $0x2c] sm:$0xf]
    %v58 = vld [vmem:[#allocation5 + $0x30] sm:$0xf]
    %v59 = vld [vmem:[#allocation5 + $0x34] sm:$0xf]
    %v60 = vld [vmem:[#allocation5 + $0x38] sm:$0xf]
    %v61 = vld [vmem:[#allocation5 + $0x3c] sm:$0xf]
    %v62 = vld [vmem:[%s2] sm:$0x1]
    %v64 = vlaneseq
    %v65 = vshrl.u32 %v64, 7
    %v66 = vsub.s32 0, %v65
    %v67 = vrot.slane %v62, %v66
    %v71 = vunpack.c.l.b16 %v44
    %v72 = vunpack.c.l.b16 %v45
    %v73 = vpack.c.b16 %v72, %v71
    %v91 = vunpack.c.l.b16 %v46
    %v92 = vunpack.c.l.b16 %v47
    %v93 = vunpack.c.l.b16 %v48
    %v94 = vunpack.c.l.b16 %v49
    %v95 = vunpack.c.l.b16 %v50
    %v96 = vunpack.c.l.b16 %v51
    %v97 = vunpack.c.l.b16 %v52
    %v98 = vunpack.c.l.b16 %v53
    %v99 = vunpack.c.l.b16 %v54
    %v100 = vunpack.c.l.b16 %v55
    %v101 = vunpack.c.l.b16 %v56
    %v102 = vunpack.c.l.b16 %v57
    %v103 = vunpack.c.l.b16 %v58
    %v104 = vunpack.c.l.b16 %v59
    %v105 = vunpack.c.l.b16 %v60
    %v106 = vunpack.c.l.b16 %v61
    %v107 = vpack.c.b16 %v92, %v91
    %v108 = vpack.c.b16 %v94, %v93
    %v109 = vpack.c.b16 %v96, %v95
    %v110 = vpack.c.b16 %v98, %v97
    %v111 = vpack.c.b16 %v100, %v99
    %v112 = vpack.c.b16 %v102, %v101
    %v113 = vpack.c.b16 %v104, %v103
    %v114 = vpack.c.b16 %v106, %v105
    %123 = vmatprep.subr.bf16.mxu0 0
    %124 = vmatpush1.bf16.msra.mxu0 %v107
    %125 = vmatprep.subr.bf16.mxu0 0
    %126 = vmatpush1.bf16.msra.mxu0 %v108
    %127 = vmatprep.subr.bf16.mxu0 0
    %128 = vmatpush1.bf16.msra.mxu0 %v109
    %129 = vmatprep.subr.bf16.mxu0 0
    %130 = vmatpush1.bf16.msra.mxu0 %v110
    %131 = vmatprep.subr.bf16.mxu0 0
    %132 = vmatpush1.bf16.msra.mxu0 %v111
    %133 = vmatprep.subr.bf16.mxu0 0
    %134 = vmatpush1.bf16.msra.mxu0 %v112
    %135 = vmatprep.subr.bf16.mxu0 0
    %136 = vmatpush1.bf16.msra.mxu0 %v113
    %137 = vmatprep.subr.bf16.mxu0 0
    %138 = vmatpush1.bf16.msra.mxu0 %v114
    %139 = vmatprep.subr.bf16.mxu0 0
    %140 = vmatpush1.bf16.msra.mxu0 0
    %141 = vmatprep.subr.bf16.mxu0 0
    %142 = vmatpush1.bf16.msra.mxu0 0
    %143 = vmatprep.subr.bf16.mxu0 0
    %144 = vmatpush1.bf16.msra.mxu0 0
    %145 = vmatprep.subr.bf16.mxu0 0
    %146 = vmatpush1.bf16.msra.mxu0 0
    %147 = vmatprep.subr.bf16.mxu0 0
    %148 = vmatpush1.bf16.msra.mxu0 0
    %149 = vmatprep.subr.bf16.mxu0 0
    %150 = vmatpush1.bf16.msra.mxu0 0
    %151 = vmatprep.subr.bf16.mxu0 0
    %152 = vmatpush1.bf16.msra.mxu0 0
    %153 = vmatprep.subr.bf16.mxu0 0
    %154 = vmatpush1.bf16.msra.mxu0 0
    %155 = vmatprep.mubr.bf16.mxu0 0
    %156 = vmatmul.mubr.bf16.gmra.mrb[0].mxu0 %v73
    %v157 = vpop.f32.mrb[0].mxu0
    %v158 = vadd.f32 %v67, %v157
    %v159 = vpop.f32.mrb[0].mxu0
    %v160 = vpop.f32.mrb[0].mxu0
    %v161 = vadd.f32 %v67, %v160
    %v162 = vpop.f32.mrb[0].mxu0
    %163 = vdwg.mxu0
    %164 = vst [vmem:[#allocation7] sm:$0xff] %v158
    %165 = vst [vmem:[#allocation7 + $0x8] sm:$0xff] %v161
    // Predicated region
    $region22: #{tpu_custom_call.1} parent=1 // pred_check
      _
    $region23: #{tpu_custom_call.1} parent=1 // pred_check_branch
      %167 = sbr.rel (0) target = $region25
    $region24: #{tpu_custom_call.1} parent=1 // pred_region
      %s169 = ssub.s32 256, 256
      %170 = vsyncadd [#allocation4], %s169
      %s171 = sshll.u32 [#allocation7], 4
      %s172 = int_to_ptr.vmem [resolvable:$true] %s171
      %177 = dma.vmem_to_hbm [thread:$0]  %s172, 256, %s3, [#allocation4], 128, 128, 8
    $region25: #{tpu_custom_call.1} parent=1 // pred_fallthru
      _
    // Predicated region
    $region26: #{tpu_custom_call.1} parent=1 // pred_check
      _
    $region27: #{tpu_custom_call.1} parent=1 // pred_check_branch
      %179 = sbr.rel (0) target = $region29
    $region28: #{tpu_custom_call.1} parent=1 // pred_region
      %180 = dma.done [#allocation4], 256
    $region29: #{tpu_custom_call.1} parent=1 // pred_fallthru
      _
    %181 = vsyncpa [#allocation3], 1
    %182 = vsyncpa [#allocation6], 1
    %183 = vsyncpa [#allocation4], 1

</llo_original>
